<compile_context>
chip_gen: v7x
topology: tpu7x:2x2x1
jax: 0.10.0
libtpu: 0.0.40
codegen_flags: <defaults>
</compile_context>

<pallas_src>
import jax
import jax.numpy as jnp
from jax import lax
from jax.experimental import pallas as pl
from jax.experimental.pallas import tpu as pltpu


def gaussian_head_kernel(h_ref, w_ref, b_ref, out_ref):
    o = out_ref.shape[0] // 2

    h = h_ref[...]                                            # (TB, H)

    # Fused mu+sigma heads, transposed output: (2O, H) x (TB, H) contracted
    # over H -> (2O, TB).  Rows (batch*time) land on the lane axis -> dense
    # stores / writeback DMAs.  Weight stays in PyTorch (O, H) layout.
    pre = lax.dot_general(
        w_ref[...], h,
        dimension_numbers=(((1,), (1,)), ((), ())),
        preferred_element_type=jnp.float32)                   # (2O, TB)
    pre = pre + b_ref[...]                                    # bias (2O, 1) bcast

    pre_mu = pre[:o]                                          # (O, TB)
    pre_sig = pre[o:]                                         # (O, TB)

    # Thresholded softplus, only on the sigma half (no EUP work on mu).
    sigma = jnp.where(pre_sig > 20.0,
                      pre_sig,
                      jnp.log1p(jnp.exp(jnp.minimum(pre_sig, 20.0)))) + 1e-6

    out_ref[:o, :] = pre_mu.astype(out_ref.dtype)
    out_ref[o:, :] = sigma.astype(out_ref.dtype)


def _round_up(x, m):
    return ((x + m - 1) // m) * m


def gaussian_forward(h, w_mu, b_mu, w_sigma, b_sigma, *, row_block=2048):
    """Fused Gaussian head.

    h:        (N, H) f32  -- N may be batch, or batch*timesteps stacked.
    w_*:      (O, H) f32  -- PyTorch nn.Linear weight layout (NOT transposed).
    b_*:      (O,)   f32
    Returns (mu, sigma), each (N, O); leading dim squeezed when N == 1
    (matching torch's .squeeze(0) on an (N, O) tensor).
    """
    n, hdim = h.shape
    o = w_mu.shape[0]

    # Fuse the two heads into one weight / one bias (tiny; for a real model
    # these would be folded at build time).
    w = jnp.concatenate([w_mu, w_sigma], axis=0)              # (2O, H)
    b = jnp.concatenate([b_mu, b_sigma], axis=0).reshape(2 * o, 1)

    # Row tiling.  Small inputs: single full-extent block (block dims equal the
    # full array dims, so no (8,128) divisibility requirement).  Large inputs:
    # lane-aligned (multiple-of-128) row blocks, capped at row_block, with at
    # least 2 grid steps so "parallel" sharding engages both TCs on v7x.
    if n <= 256:
        tb = n
    else:
        tb = max(128, min(row_block, _round_up(pl.cdiv(n, 2), 128)))
    grid = (pl.cdiv(n, tb),)

    out = pl.pallas_call(
        gaussian_head_kernel,
        out_shape=jax.ShapeDtypeStruct((2 * o, n), h.dtype),
        grid=grid,
        in_specs=[
            pl.BlockSpec((tb, hdim), lambda i: (i, 0)),       # h row block
            pl.BlockSpec((2 * o, hdim), lambda i: (0, 0)),    # fused W (resident)
            pl.BlockSpec((2 * o, 1), lambda i: (0, 0)),       # fused b (resident)
        ],
        out_specs=pl.BlockSpec((2 * o, tb), lambda i: (0, i)),
        compiler_params=pltpu.CompilerParams(
            dimension_semantics=("parallel",)),               # v7x: 2 TCs
    )(h, w, b)

    mu = out[:o].T                                            # (N, O)
    sigma = out[o:].T                                         # (N, O)
    if n == 1:  # torch .squeeze(0)
        mu = mu[0]
        sigma = sigma[0]
    return mu, sigma


def _reference(h, w_mu, b_mu, w_sigma, b_sigma):
    mu = h @ w_mu.T + b_mu
    pre = h @ w_sigma.T + b_sigma
    sigma = jnp.where(pre > 20.0,
                      pre,
                      jnp.log1p(jnp.exp(jnp.minimum(pre, 20.0)))) + 1e-6
    return mu, sigma


if __name__ == "__main__":
    hidden_size = 32
    output_size = 1          # DeepAR uses Gaussian(hidden_size, 1)
    batch = 2

    key = jax.random.PRNGKey(0)
    k_h, k_wm, k_bm, k_ws, k_bs, k_hb = jax.random.split(key, 6)

    # Deterministic params (PyTorch Linear shapes: W (O, H), b (O,)).
    bound = 1.0 / jnp.sqrt(hidden_size)
    w_mu = jax.random.uniform(k_wm, (output_size, hidden_size),
                              minval=-bound, maxval=bound, dtype=jnp.float32)
    b_mu = jax.random.uniform(k_bm, (output_size,),
                              minval=-bound, maxval=bound, dtype=jnp.float32)
    w_sigma = jax.random.uniform(k_ws, (output_size, hidden_size),
                                 minval=-bound, maxval=bound, dtype=jnp.float32)
    b_sigma = jax.random.uniform(k_bs, (output_size,),
                                 minval=-bound, maxval=bound, dtype=jnp.float32)

    # 1) Per-timestep call (tiny batch, single full-extent block).
    h = jax.random.normal(k_h, (batch, hidden_size), dtype=jnp.float32)
    mu_t, sigma_t = gaussian_forward(h, w_mu, b_mu, w_sigma, b_sigma)
    jax.block_until_ready((mu_t, sigma_t))

    mu_ref, sigma_ref = _reference(h, w_mu, b_mu, w_sigma, b_sigma)
    assert mu_t.shape == (batch, output_size)
    assert sigma_t.shape == (batch, output_size)
    assert jnp.allclose(mu_t, mu_ref, atol=1e-5, rtol=1e-4)
    assert jnp.allclose(sigma_t, sigma_ref, atol=1e-5, rtol=1e-4)
    assert bool(jnp.all(sigma_t > 0))

    # 2) Timestep-batched call (rows = batch * T): exercises the lane-aligned
    #    row grid (>= 2 steps for megacore) and the ragged, pad-free tail block.
    n_rows = 300  # tb -> 256, grid of 2, last block ragged (no jnp.pad)
    h_big = jax.random.normal(k_hb, (n_rows, hidden_size), dtype=jnp.float32)
    mu_b, sigma_b = gaussian_forward(h_big, w_mu, b_mu, w_sigma, b_sigma)
    jax.block_until_ready((mu_b, sigma_b))

    mu_bref, sigma_bref = _reference(h_big, w_mu, b_mu, w_sigma, b_sigma)
    assert mu_b.shape == (n_rows, output_size)
    assert sigma_b.shape == (n_rows, output_size)
    assert jnp.allclose(mu_b, mu_bref, atol=1e-5, rtol=1e-4)
    assert jnp.allclose(sigma_b, sigma_bref, atol=1e-5, rtol=1e-4)
    assert bool(jnp.all(sigma_b > 0))

    print("KERNEL_OK")
</pallas_src>

<mosaic_0001>
module attributes {stable_mosaic.version = 11 : i64} {
  func.func @gaussian_head_kernel(%arg0: i32, %arg1: memref<2x32xf32, #tpu.memory_space<vmem>>, %arg2: memref<2x32xf32, #tpu.memory_space<vmem>>, %arg3: memref<2x1xf32, #tpu.memory_space<vmem>>, %arg4: memref<2x2xf32, #tpu.memory_space<vmem>>) attributes {dimension_semantics = [#tpu.dimension_semantics<parallel>], iteration_bounds = array<i64: 1>, scalar_prefetch = 0 : i64, scratch_operands = 0 : i64, tpu.core_type = #tpu.core_type<tc>, window_params = [{transform_indices = @transform_0, window_bounds = array<i64: 2, 32>}, {pipeline_mode = #tpu.pipeline_mode<synchronous>, transform_indices = @transform_1, window_bounds = array<i64: 2, 32>}, {pipeline_mode = #tpu.pipeline_mode<synchronous>, transform_indices = @transform_2, window_bounds = array<i64: 2, 1>}, {transform_indices = @transform_3, window_bounds = array<i64: 2, 2>}]} {
    %c0 = arith.constant 0 : index
    %c0_0 = arith.constant 0 : index
    %0 = vector.load %arg1[%c0, %c0_0] : memref<2x32xf32, #tpu.memory_space<vmem>>, vector<2x32xf32>
    %c0_1 = arith.constant 0 : index
    %c0_2 = arith.constant 0 : index
    %1 = vector.load %arg2[%c0_1, %c0_2] : memref<2x32xf32, #tpu.memory_space<vmem>>, vector<2x32xf32>
    %cst = arith.constant dense<0.000000e+00> : vector<2x2xf32>
    %2 = tpu.matmul %1, %0, %cst {dimension_numbers = #tpu.dot_dimension_numbers<[1], [1], [0], [0], [0, 0, 1, 0], [], []>} : vector<2x32xf32>, vector<2x32xf32>, vector<2x2xf32> -> vector<2x2xf32>
    %c0_3 = arith.constant 0 : index
    %c0_4 = arith.constant 0 : index
    %3 = vector.load %arg3[%c0_3, %c0_4] : memref<2x1xf32, #tpu.memory_space<vmem>>, vector<2x1xf32>
    %4 = vector.broadcast %3 : vector<2x1xf32> to vector<2x2xf32>
    %5 = arith.addf %2, %4 : vector<2x2xf32>
    %6 = vector.extract_strided_slice %5 {offsets = [0, 0], sizes = [1, 2], strides = [1, 1]} : vector<2x2xf32> to vector<1x2xf32>
    %7 = vector.extract_strided_slice %5 {offsets = [1, 0], sizes = [1, 2], strides = [1, 1]} : vector<2x2xf32> to vector<1x2xf32>
    %cst_5 = arith.constant 2.000000e+01 : f32
    %8 = vector.broadcast %cst_5 : f32 to vector<1x2xf32>
    %9 = arith.cmpf ogt, %7, %8 : vector<1x2xf32>
    %cst_6 = arith.constant 2.000000e+01 : f32
    %10 = vector.broadcast %cst_6 : f32 to vector<1x2xf32>
    %11 = arith.minimumf %7, %10 : vector<1x2xf32>
    %12 = math.exp %11 : vector<1x2xf32>
    %13 = math.log1p %12 : vector<1x2xf32>
    %14 = arith.select %9, %7, %13 : vector<1x2xi1>, vector<1x2xf32>
    %cst_7 = arith.constant 9.99999997E-7 : f32
    %15 = vector.broadcast %cst_7 : f32 to vector<1x2xf32>
    %16 = arith.addf %14, %15 : vector<1x2xf32>
    %c0_8 = arith.constant 0 : index
    %c0_9 = arith.constant 0 : index
    %17 = vector.load %arg4[%c0_8, %c0_9] : memref<2x2xf32, #tpu.memory_space<vmem>>, vector<1x2xf32>
    tpu.vector_store %arg4[%c0_8, %c0_9], %6 {strides = array<i32>} : memref<2x2xf32, #tpu.memory_space<vmem>>, vector<1x2xf32>,
    %c1 = arith.constant 1 : index
    %c0_10 = arith.constant 0 : index
    %18 = vector.load %arg4[%c1, %c0_10] : memref<2x2xf32, #tpu.memory_space<vmem>>, vector<1x2xf32>
    tpu.vector_store %arg4[%c1, %c0_10], %16 {strides = array<i32>} : memref<2x2xf32, #tpu.memory_space<vmem>>, vector<1x2xf32>,
    return
  }
  func.func @transform_0(%arg0: i32) -> (i32, i32) {
    %c0_i32 = arith.constant 0 : i32
    %c0_i32_0 = arith.constant 0 : i32
    return %arg0, %c0_i32 : i32, i32
  }
  func.func @transform_1(%arg0: i32) -> (i32, i32) {
    %c0_i32 = arith.constant 0 : i32
    %c0_i32_0 = arith.constant 0 : i32
    %c0_i32_1 = arith.constant 0 : i32
    return %c0_i32, %c0_i32_0 : i32, i32
  }
  func.func @transform_2(%arg0: i32) -> (i32, i32) {
    %c0_i32 = arith.constant 0 : i32
    %c0_i32_0 = arith.constant 0 : i32
    %c0_i32_1 = arith.constant 0 : i32
    return %c0_i32, %c0_i32_0 : i32, i32
  }
  func.func @transform_3(%arg0: i32) -> (i32, i32) {
    %c0_i32 = arith.constant 0 : i32
    %c0_i32_0 = arith.constant 0 : i32
    return %c0_i32, %arg0 : i32, i32
  }
}

</mosaic_0001>

<llo_original>
// kernel: tpu_custom_call.1
$region0: #{tpu_custom_call.1}
  #allocation0 [shape = 'u32[]', space=smem, size = 0x4, offset = 0x4, fixed_abs, tag = 'smem constant byte address 0x4 - core index']
  #allocation1 [shape = 'u32[144,128]{1,0:T(1,128)}', space=vmem, size = 0x12000, scoped, tag = 'internal scratch']
  %s0 = inlined_call_operand.vmem [shape: f32[2,32], index: 0, kind: input, shape index: {}]
  %s1 = inlined_call_operand.vmem [shape: f32[2,32], index: 1, kind: input, shape index: {}]
  %s2 = inlined_call_operand.vmem [shape: f32[2,1], index: 2, kind: input, shape index: {}]
  %s3 = inlined_call_operand.hbm [shape: f32[2,2], index: 3, kind: output, shape index: {}]
  %s4 = sld [smem:[#allocation0]]
  $region22: #{tpu_custom_call.1} parent=0
    _
  %s6 = ssub.s32 1, %s4
  %s7 = scalar_select 0, %s6, %s4
  $region1: #{tpu_custom_call.1} parent=0
    #allocation2 [shape = 'u8[1024]{0}', space=vmem, size = 0x400, scoped, tag = 'output window, operand 0, single buffered']
    #allocation3 [shape = 's32[1]{0}', space=sflag, size = 0x4, scoped, tag = 'scoped memory for tpu_custom_call.1']
    %8 = vsyncpa [#allocation3], 0
    // Predicated region
    $region2: #{tpu_custom_call.1} parent=1 // pred_check
      _
    $region3: #{tpu_custom_call.1} parent=1 // pred_check_branch
      %10 = sbr.rel (0) target = $region5
    $region4: #{tpu_custom_call.1} parent=1 // pred_region
      _
    $region5: #{tpu_custom_call.1} parent=1 // pred_fallthru
      _
    // Predicated region
    $region6: #{tpu_custom_call.1} parent=1 // pred_check
      _
    $region7: #{tpu_custom_call.1} parent=1 // pred_check_branch
      %12 = sbr.rel (0) target = $region9
    $region8: #{tpu_custom_call.1} parent=1 // pred_region
      _
    $region9: #{tpu_custom_call.1} parent=1 // pred_fallthru
      _
    // Predicated region
    $region10: #{tpu_custom_call.1} parent=1 // pred_check
      _
    $region11: #{tpu_custom_call.1} parent=1 // pred_check_branch
      %14 = sbr.rel (0) target = $region13
    $region12: #{tpu_custom_call.1} parent=1 // pred_region
      _
    $region13: #{tpu_custom_call.1} parent=1 // pred_fallthru
      _
    %v15 = vld [vmem:[%s0] sm:$0x3]
    %v16 = vld [vmem:[%s1] sm:$0x3]
    %v17 = vld [vmem:[%s2] sm:$0x3]
    %19 = vset.pattern.permute.xlu0 0
    %20 = vperm.xlu0 %19, %v17
    %v21 = vpop.permute.xlu0 %20
    %vm23 = vcmask 261120
    %v25 = vsel %vm23, %v16, 0
    %v28 = vsel %vm23, %v15, 0
    %30 = vmatprep.subr.mxu0 0.0
    %31 = vmatpush1.xpose.msra.mxu0 %v28
    %32 = vmatprep.subr.mxu0 0.0
    %33 = vmatpush1.xpose.msra.mxu0 0.0
    %34 = vmatprep.subr.mxu0 0.0
    %35 = vmatpush1.xpose.msra.mxu0 0.0
    %36 = vmatprep.subr.mxu0 0.0
    %37 = vmatpush1.xpose.msra.mxu0 0.0
    %38 = vmatprep.subr.mxu0 0.0
    %39 = vmatpush1.xpose.msra.mxu0 0.0
    %40 = vmatprep.subr.mxu0 0.0
    %41 = vmatpush1.xpose.msra.mxu0 0.0
    %42 = vmatprep.subr.mxu0 0.0
    %43 = vmatpush1.xpose.msra.mxu0 0.0
    %44 = vmatprep.subr.mxu0 0.0
    %45 = vmatpush1.xpose.msra.mxu0 0.0
    %46 = vmatprep.subr.mxu0 0.0
    %47 = vmatpush1.xpose.msra.mxu0 0.0
    %48 = vmatprep.subr.mxu0 0.0
    %49 = vmatpush1.xpose.msra.mxu0 0.0
    %50 = vmatprep.subr.mxu0 0.0
    %51 = vmatpush1.xpose.msra.mxu0 0.0
    %52 = vmatprep.subr.mxu0 0.0
    %53 = vmatpush1.xpose.msra.mxu0 0.0
    %54 = vmatprep.subr.mxu0 0.0
    %55 = vmatpush1.xpose.msra.mxu0 0.0
    %56 = vmatprep.subr.mxu0 0.0
    %57 = vmatpush1.xpose.msra.mxu0 0.0
    %58 = vmatprep.subr.mxu0 0.0
    %59 = vmatpush1.xpose.msra.mxu0 0.0
    %60 = vmatprep.subr.mxu0 0.0
    %61 = vmatpush1.xpose.msra.mxu0 0.0
    %62 = vmatprep.subr.mxu0 0.0
    %63 = vmatpush1.xpose.msra.mxu0 0.0
    %64 = vmatprep.subr.mxu0 0.0
    %65 = vmatpush1.xpose.msra.mxu0 0.0
    %66 = vmatprep.subr.mxu0 0.0
    %67 = vmatpush1.xpose.msra.mxu0 0.0
    %68 = vmatprep.subr.mxu0 0.0
    %69 = vmatpush1.xpose.msra.mxu0 0.0
    %70 = vmatprep.subr.mxu0 0.0
    %71 = vmatpush1.xpose.msra.mxu0 0.0
    %72 = vmatprep.subr.mxu0 0.0
    %73 = vmatpush1.xpose.msra.mxu0 0.0
    %74 = vmatprep.subr.mxu0 0.0
    %75 = vmatpush1.xpose.msra.mxu0 0.0
    %76 = vmatprep.subr.mxu0 0.0
    %77 = vmatpush1.xpose.msra.mxu0 0.0
    %78 = vmatprep.subr.mxu0 0.0
    %79 = vmatpush1.xpose.msra.mxu0 0.0
    %80 = vmatprep.subr.mxu0 0.0
    %81 = vmatpush1.xpose.msra.mxu0 0.0
    %82 = vmatprep.subr.mxu0 0.0
    %83 = vmatpush1.xpose.msra.mxu0 0.0
    %84 = vmatprep.subr.mxu0 0.0
    %85 = vmatpush1.xpose.msra.mxu0 0.0
    %86 = vmatprep.subr.mxu0 0.0
    %87 = vmatpush1.xpose.msra.mxu0 0.0
    %88 = vmatprep.subr.mxu0 0.0
    %89 = vmatpush1.xpose.msra.mxu0 0.0
    %90 = vmatprep.subr.mxu0 0.0
    %91 = vmatpush1.xpose.msra.mxu0 0.0
    %92 = vmatprep.subr.mxu0 0.0
    %93 = vmatpush1.xpose.msra.mxu0 0.0
    %94 = vmatprep.mubr.f32.mxu0 0.0
    %95 = vmatmul.mubr.f32.gmra.mrb[0].mxu0 %v25
    %v96 = vpop.f32.mrb[0].mxu0
    %v97 = vadd.f32 %v21, %v96
    %v98 = vpop.f32.mrb[0].mxu0
    %99 = vdwg.mxu0
    %vm100 = vcmp.gt.f32.partialorder %v97, 20.0
    %v101 = vmin.f32 %v97, 20.0
    %v102 = vmul.f32 %v101, 1.442695
    %v103 = vpow.pop %v102
    %v104 = vadd.f32 %v103, 1.0
    %v105 = vlog2.pop %v104
    %v106 = vmul.f32 %v105, 0.6931472
    %v107 = vmul.f32 -0.5, %v103
    %v108 = vadd.f32 %v107, 1.0
    %v109 = vmul.f32 %v108, %v103
    %v110 = vand.u32 2147483647, %v103
    %vm111 = vcmp.lt.f32.partialorder %v110, 0.0004427343
    %v112 = vsel %vm111, %v109, %v106
    %v113 = vsel %vm100, %v97, %v112
    %v114 = vadd.f32 %v113, 1e-06
    %vm115 = vcmask 8192
    %116 = vst.msk [vmem:[#allocation2] sm:$0x1] %vm115, %v97
    %vm117 = vcmask 9217
    %118 = vst.msk [vmem:[#allocation2] sm:$0x2] %vm117, %v114
    // Predicated region
    $region14: #{tpu_custom_call.1} parent=1 // pred_check
      _
    $region15: #{tpu_custom_call.1} parent=1 // pred_check_branch
      %120 = sbr.rel (0) target = $region17
    $region16: #{tpu_custom_call.1} parent=1 // pred_region
      %s122 = ssub.s32 32, 32
      %123 = vsyncadd [#allocation3], %s122
      %s125 = sshll.u32 [#allocation2], 4
      %s126 = int_to_ptr.vmem [resolvable:$true] %s125
      %128 = dma.vmem_to_hbm [thread:$0]  %s126, 32, %s3, [#allocation3]
    $region17: #{tpu_custom_call.1} parent=1 // pred_fallthru
      _
    // Predicated region
    $region18: #{tpu_custom_call.1} parent=1 // pred_check
      _
    $region19: #{tpu_custom_call.1} parent=1 // pred_check_branch
      %130 = sbr.rel (0) target = $region21
    $region20: #{tpu_custom_call.1} parent=1 // pred_region
      %131 = dma.done [#allocation3], 32
    $region21: #{tpu_custom_call.1} parent=1 // pred_fallthru
      _
    %132 = vsyncpa [#allocation3], 1

</llo_original>
